<compile_context>
chip_gen: v7x
topology: tpu7x:2x2x1
jax: 0.10.0
libtpu: 0.0.40
codegen_flags: <defaults>
</compile_context>

<pallas_src>
import functools

import numpy as np
import jax
import jax.numpy as jnp
from jax.experimental import pallas as pl
from jax.experimental.pallas import tpu as pltpu

# ---- "Config" (consistent with the module) ----
N_EMBED = 32
N_HEAD = 4
HEAD_SIZE = N_EMBED // N_HEAD   # 8
BLOCK_SIZE = 8                  # max sequence length (== T here)
BATCH = 2

_NEG_BIG = -1e30                # finite "minus infinity" for masked scores


def _head_kernel(x_ref, w_ref, bias_ref, o_ref):
    # x_ref    : (B*T, C)      flattened batch*sequence rows
    # w_ref    : (3, C, hs)    [Wq * C**-0.5, Wk, Wv] — each operand starts at lane 0
    # bias_ref : (B*T, B*T)    block-diagonal causal additive bias {0, -1e30}
    # o_ref    : (B*T, hs)
    x = x_ref[...]
    q = jnp.dot(x, w_ref[0], preferred_element_type=jnp.float32)   # scale folded into Wq
    k = jnp.dot(x, w_ref[1], preferred_element_type=jnp.float32)
    v = jnp.dot(x, w_ref[2], preferred_element_type=jnp.float32)

    # Scores over all B*T rows at once; contract last dims of q and k so no explicit
    # k.T (XLU transpose) is materialized on the critical path.
    s = jax.lax.dot_general(q, k, (((1,), (1,)), ((), ())),
                            preferred_element_type=jnp.float32)     # (BT, BT)
    s = s + bias_ref[...]          # constant mask bias: no per-call integer/select math

    # Softmax (every row has at least its diagonal unmasked, so max/denom are safe).
    s = s - jnp.max(s, axis=-1, keepdims=True)
    p = jnp.exp(s)
    p = p / jnp.sum(p, axis=-1, keepdims=True)   # exact reciprocal; dropout -> identity

    o_ref[...] = jnp.dot(p, v, preferred_element_type=jnp.float32).astype(o_ref.dtype)


def fuse_head_params(wq, wk, wv, n_embed):
    """One-time fusion: stack [Wq * n_embed**-0.5, Wk, Wv] -> (3, C, hs).

    The attention scale is n_embed**-0.5 (C**-0.5), matching the PyTorch reference,
    NOT the more common head_size**-0.5.
    """
    scale = float(n_embed) ** -0.5
    return jnp.stack([wq * scale, wk, wv], axis=0)


@functools.lru_cache(maxsize=8)
def _causal_bias_np(batch, seq_len):
    """Compile-time-constant block-diagonal causal additive bias for flattened (B*T) rows."""
    n = batch * seq_len
    rows = np.arange(n)[:, None]
    cols = np.arange(n)[None, :]
    same_batch = (rows // seq_len) == (cols // seq_len)
    causal = (cols % seq_len) <= (rows % seq_len)
    return np.where(same_batch & causal, 0.0, _NEG_BIG).astype(np.float32)


def head_forward(x, w3):
    B, T, C = x.shape
    hs = w3.shape[-1]
    x2d = x.reshape(B * T, C)
    bias = jnp.asarray(_causal_bias_np(B, T))   # constant-folded under jit

    vmem = pl.BlockSpec(memory_space=pltpu.MemorySpace.VMEM)
    out2d = pl.pallas_call(
        _head_kernel,
        out_shape=jax.ShapeDtypeStruct((B * T, hs), x.dtype),
        in_specs=[vmem, vmem, vmem],
        out_specs=vmem,
    )(x2d, w3, bias)
    # Single gridless invocation: no grid / double-buffering / vmem_limit on any chip gen.
    return out2d.reshape(B, T, hs)


# ---------------- pure-JAX reference (mirrors the PyTorch forward) -----------
def head_reference(x, wq, wk, wv):
    B, T, C = x.shape
    q = x @ wq
    k = x @ wk
    v = x @ wv
    s = jnp.einsum("btd,bsd->bts", q, k) * (C ** -0.5)
    tril = jnp.tril(jnp.ones((T, T), dtype=bool))
    s = jnp.where(tril, s, -jnp.inf)
    p = jax.nn.softmax(s, axis=-1)
    return jnp.einsum("bts,bsd->btd", p, v)


if __name__ == "__main__":
    key = jax.random.PRNGKey(0)
    k_x, k_q, k_k, k_v = jax.random.split(key, 4)
    x = jax.random.normal(k_x, (BATCH, BLOCK_SIZE, N_EMBED), jnp.float32)
    wq = 0.05 * jax.random.normal(k_q, (N_EMBED, HEAD_SIZE), jnp.float32)
    wk = 0.05 * jax.random.normal(k_k, (N_EMBED, HEAD_SIZE), jnp.float32)
    wv = 0.05 * jax.random.normal(k_v, (N_EMBED, HEAD_SIZE), jnp.float32)

    w3 = fuse_head_params(wq, wk, wv, N_EMBED)   # one-time fusion + scale fold

    out = jax.block_until_ready(head_forward(x, w3))
    ref = head_reference(x, wq, wk, wv)

    assert out.shape == (BATCH, BLOCK_SIZE, HEAD_SIZE)
    # exact softmax normalization -> tight tolerance vs the pure-JAX reference
    assert jnp.allclose(out, ref, atol=1e-5, rtol=1e-5), "mismatch vs reference"
    print("KERNEL_OK")
</pallas_src>

<mosaic_0001>
module attributes {stable_mosaic.version = 11 : i64} {
  func.func @_head_kernel(%arg0: memref<16x32xf32, #tpu.memory_space<vmem>>, %arg1: memref<3x32x8xf32, #tpu.memory_space<vmem>>, %arg2: memref<16x16xf32, #tpu.memory_space<vmem>>, %arg3: memref<16x8xf32, #tpu.memory_space<vmem>>) attributes {dimension_semantics = [], scalar_prefetch = 0 : i64, scratch_operands = 0 : i64, tpu.core_type = #tpu.core_type<tc>} {
    %c0 = arith.constant 0 : index
    %c0_0 = arith.constant 0 : index
    %0 = vector.load %arg0[%c0, %c0_0] : memref<16x32xf32, #tpu.memory_space<vmem>>, vector<16x32xf32>
    %c0_1 = arith.constant 0 : index
    %c0_2 = arith.constant 0 : index
    %c0_3 = arith.constant 0 : index
    %1 = vector.load %arg1[%c0_1, %c0_2, %c0_3] : memref<3x32x8xf32, #tpu.memory_space<vmem>>, vector<1x32x8xf32>
    %2 = vector.shape_cast %1 : vector<1x32x8xf32> to vector<32x8xf32>
    %cst = arith.constant dense<0.000000e+00> : vector<16x8xf32>
    %3 = tpu.matmul %0, %2, %cst {dimension_numbers = #tpu.dot_dimension_numbers<[1], [0], [0], [1], [0, 0, 1, 1], [], []>} : vector<16x32xf32>, vector<32x8xf32>, vector<16x8xf32> -> vector<16x8xf32>
    %c1 = arith.constant 1 : index
    %c0_4 = arith.constant 0 : index
    %c0_5 = arith.constant 0 : index
    %4 = vector.load %arg1[%c1, %c0_4, %c0_5] : memref<3x32x8xf32, #tpu.memory_space<vmem>>, vector<1x32x8xf32>
    %5 = vector.shape_cast %4 : vector<1x32x8xf32> to vector<32x8xf32>
    %cst_6 = arith.constant dense<0.000000e+00> : vector<16x8xf32>
    %6 = tpu.matmul %0, %5, %cst_6 {dimension_numbers = #tpu.dot_dimension_numbers<[1], [0], [0], [1], [0, 0, 1, 1], [], []>} : vector<16x32xf32>, vector<32x8xf32>, vector<16x8xf32> -> vector<16x8xf32>
    %c2 = arith.constant 2 : index
    %c0_7 = arith.constant 0 : index
    %c0_8 = arith.constant 0 : index
    %7 = vector.load %arg1[%c2, %c0_7, %c0_8] : memref<3x32x8xf32, #tpu.memory_space<vmem>>, vector<1x32x8xf32>
    %8 = vector.shape_cast %7 : vector<1x32x8xf32> to vector<32x8xf32>
    %cst_9 = arith.constant dense<0.000000e+00> : vector<16x8xf32>
    %9 = tpu.matmul %0, %8, %cst_9 {dimension_numbers = #tpu.dot_dimension_numbers<[1], [0], [0], [1], [0, 0, 1, 1], [], []>} : vector<16x32xf32>, vector<32x8xf32>, vector<16x8xf32> -> vector<16x8xf32>
    %cst_10 = arith.constant dense<0.000000e+00> : vector<16x16xf32>
    %10 = tpu.matmul %3, %6, %cst_10 {dimension_numbers = #tpu.dot_dimension_numbers<[1], [1], [0], [0], [0, 0, 1, 0], [], []>} : vector<16x8xf32>, vector<16x8xf32>, vector<16x16xf32> -> vector<16x16xf32>
    %c0_11 = arith.constant 0 : index
    %c0_12 = arith.constant 0 : index
    %11 = vector.load %arg2[%c0_11, %c0_12] : memref<16x16xf32, #tpu.memory_space<vmem>>, vector<16x16xf32>
    %12 = arith.addf %10, %11 : vector<16x16xf32>
    %cst_13 = arith.constant dense<0xFF800000> : vector<16xf32>
    %13 = vector.multi_reduction <maximumf>, %12, %cst_13 [1] : vector<16x16xf32> to vector<16xf32>
    %14 = vector.shape_cast %13 : vector<16xf32> to vector<16x1xf32>
    %15 = vector.broadcast %14 : vector<16x1xf32> to vector<16x16xf32>
    %16 = arith.subf %12, %15 : vector<16x16xf32>
    %17 = math.exp %16 : vector<16x16xf32>
    %cst_14 = arith.constant dense<0.000000e+00> : vector<16xf32>
    %18 = vector.multi_reduction <add>, %17, %cst_14 [1] : vector<16x16xf32> to vector<16xf32>
    %19 = vector.shape_cast %18 : vector<16xf32> to vector<16x1xf32>
    %20 = vector.broadcast %19 : vector<16x1xf32> to vector<16x16xf32>
    %21 = arith.divf %17, %20 : vector<16x16xf32>
    %cst_15 = arith.constant dense<0.000000e+00> : vector<16x8xf32>
    %22 = tpu.matmul %21, %9, %cst_15 {dimension_numbers = #tpu.dot_dimension_numbers<[1], [0], [0], [1], [0, 0, 1, 1], [], []>} : vector<16x16xf32>, vector<16x8xf32>, vector<16x8xf32> -> vector<16x8xf32>
    %c0_16 = arith.constant 0 : index
    %c0_17 = arith.constant 0 : index
    %23 = vector.load %arg3[%c0_16, %c0_17] : memref<16x8xf32, #tpu.memory_space<vmem>>, vector<16x8xf32>
    tpu.vector_store %arg3[%c0_16, %c0_17], %22 {strides = array<i32>} : memref<16x8xf32, #tpu.memory_space<vmem>>, vector<16x8xf32>,
    return
  }
}

</mosaic_0001>

<llo_original>
// kernel: tpu_custom_call.1
$region0: #{tpu_custom_call.1}
  #allocation0 [shape = 'u32[]', space=smem, size = 0x4, offset = 0x4, fixed_abs, tag = 'smem constant byte address 0x4 - core index']
  #allocation1 [shape = 'u32[144,128]{1,0:T(1,128)}', space=vmem, size = 0x12000, scoped, tag = 'internal scratch']
  %s0 = inlined_call_operand.vmem [shape: f32[16,32], index: 0, kind: input, shape index: {}]
  %s1 = inlined_call_operand.vmem [shape: f32[3,32,8], index: 1, kind: input, shape index: {}]
  %s2 = inlined_call_operand.vmem [shape: f32[16,16], index: 2, kind: input, shape index: {}]
  %s3 = inlined_call_operand.vmem [shape: f32[16,8], index: 3, kind: output, shape index: {}]
  %s4 = sld [smem:[#allocation0]]
  $region22: #{tpu_custom_call.1} parent=0
    _
  %s6 = ssub.s32 1, %s4
  %s7 = scalar_select 0, %s6, %s4
  // Predicated region
  $region2: #{tpu_custom_call.1} parent=0 // pred_check
    _
  $region3: #{tpu_custom_call.1} parent=0 // pred_check_branch
    %9 = sbr.rel (0) target = $region5
  $region4: #{tpu_custom_call.1} parent=0 // pred_region
    _
  $region5: #{tpu_custom_call.1} parent=0 // pred_fallthru
    _
  // Predicated region
  $region6: #{tpu_custom_call.1} parent=0 // pred_check
    _
  $region7: #{tpu_custom_call.1} parent=0 // pred_check_branch
    %11 = sbr.rel (0) target = $region9
  $region8: #{tpu_custom_call.1} parent=0 // pred_region
    _
  $region9: #{tpu_custom_call.1} parent=0 // pred_fallthru
    _
  // Predicated region
  $region10: #{tpu_custom_call.1} parent=0 // pred_check
    _
  $region11: #{tpu_custom_call.1} parent=0 // pred_check_branch
    %13 = sbr.rel (0) target = $region13
  $region12: #{tpu_custom_call.1} parent=0 // pred_region
    _
  $region13: #{tpu_custom_call.1} parent=0 // pred_fallthru
    _
  %v14 = vld [vmem:[%s0] sm:$0xff]
  %v15 = vld [vmem:[%s0 + $0x8] sm:$0xff]
  %v16 = vld [vmem:[%s1] sm:$0xff]
  %v17 = vld [vmem:[%s1 + $0x8] sm:$0xff]
  %v18 = vld [vmem:[%s1 + $0x10] sm:$0xff]
  %v19 = vld [vmem:[%s1 + $0x18] sm:$0xff]
  %vm20 = vcmask 261120
  %v22 = vsel %vm20, %v14, 0
  %v25 = vsel %vm20, %v15, 0
  %27 = vmatprep.subr.mxu0 0.0
  %28 = vmatpush1.msra.mxu0 %v16
  %29 = vmatprep.subr.mxu0 0.0
  %30 = vmatpush1.msra.mxu0 %v17
  %31 = vmatprep.subr.mxu0 0.0
  %32 = vmatpush1.msra.mxu0 %v18
  %33 = vmatprep.subr.mxu0 0.0
  %34 = vmatpush1.msra.mxu0 %v19
  %35 = vmatprep.subr.mxu0 0.0
  %36 = vmatpush1.msra.mxu0 0.0
  %37 = vmatprep.subr.mxu0 0.0
  %38 = vmatpush1.msra.mxu0 0.0
  %39 = vmatprep.subr.mxu0 0.0
  %40 = vmatpush1.msra.mxu0 0.0
  %41 = vmatprep.subr.mxu0 0.0
  %42 = vmatpush1.msra.mxu0 0.0
  %43 = vmatprep.subr.mxu0 0.0
  %44 = vmatpush1.msra.mxu0 0.0
  %45 = vmatprep.subr.mxu0 0.0
  %46 = vmatpush1.msra.mxu0 0.0
  %47 = vmatprep.subr.mxu0 0.0
  %48 = vmatpush1.msra.mxu0 0.0
  %49 = vmatprep.subr.mxu0 0.0
  %50 = vmatpush1.msra.mxu0 0.0
  %51 = vmatprep.subr.mxu0 0.0
  %52 = vmatpush1.msra.mxu0 0.0
  %53 = vmatprep.subr.mxu0 0.0
  %54 = vmatpush1.msra.mxu0 0.0
  %55 = vmatprep.subr.mxu0 0.0
  %56 = vmatpush1.msra.mxu0 0.0
  %57 = vmatprep.subr.mxu0 0.0
  %58 = vmatpush1.msra.mxu0 0.0
  %59 = vmatprep.subr.mxu0 0.0
  %60 = vmatpush1.msra.mxu0 0.0
  %61 = vmatprep.subr.mxu0 0.0
  %62 = vmatpush1.msra.mxu0 0.0
  %63 = vmatprep.subr.mxu0 0.0
  %64 = vmatpush1.msra.mxu0 0.0
  %65 = vmatprep.subr.mxu0 0.0
  %66 = vmatpush1.msra.mxu0 0.0
  %67 = vmatprep.subr.mxu0 0.0
  %68 = vmatpush1.msra.mxu0 0.0
  %69 = vmatprep.subr.mxu0 0.0
  %70 = vmatpush1.msra.mxu0 0.0
  %71 = vmatprep.subr.mxu0 0.0
  %72 = vmatpush1.msra.mxu0 0.0
  %73 = vmatprep.subr.mxu0 0.0
  %74 = vmatpush1.msra.mxu0 0.0
  %75 = vmatprep.subr.mxu0 0.0
  %76 = vmatpush1.msra.mxu0 0.0
  %77 = vmatprep.subr.mxu0 0.0
  %78 = vmatpush1.msra.mxu0 0.0
  %79 = vmatprep.subr.mxu0 0.0
  %80 = vmatpush1.msra.mxu0 0.0
  %81 = vmatprep.subr.mxu0 0.0
  %82 = vmatpush1.msra.mxu0 0.0
  %83 = vmatprep.subr.mxu0 0.0
  %84 = vmatpush1.msra.mxu0 0.0
  %85 = vmatprep.subr.mxu0 0.0
  %86 = vmatpush1.msra.mxu0 0.0
  %87 = vmatprep.subr.mxu0 0.0
  %88 = vmatpush1.msra.mxu0 0.0
  %89 = vmatprep.subr.mxu0 0.0
  %90 = vmatpush1.msra.mxu0 0.0
  %91 = vmatprep.mubr.f32.mxu0 0.0
  %92 = vmatmul.mubr.f32.gmra.mrb[0].mxu0 %v22
  %v93 = vpop.f32.mrb[0].mxu0
  %v94 = vadd.f32 0.0, %v93
  %v95 = vpop.f32.mrb[0].mxu0
  %96 = vmatprep.mubr.f32.mxu0 0.0
  %97 = vmatmul.mubr.f32.gmra.mrb[0].mxu0 %v25
  %v98 = vpop.f32.mrb[0].mxu0
  %v99 = vadd.f32 0.0, %v98
  %v100 = vpop.f32.mrb[0].mxu0
  %101 = vdwg.mxu0
  %s102 = scalar_lea.vmem %s1, 32
  %v103 = vld [vmem:[%s102] sm:$0xff]
  %v104 = vld [vmem:[%s102 + $0x8] sm:$0xff]
  %v105 = vld [vmem:[%s102 + $0x10] sm:$0xff]
  %v106 = vld [vmem:[%s102 + $0x18] sm:$0xff]
  %107 = vmatprep.subr.mxu0 0.0
  %108 = vmatpush1.msra.mxu0 %v103
  %109 = vmatprep.subr.mxu0 0.0
  %110 = vmatpush1.msra.mxu0 %v104
  %111 = vmatprep.subr.mxu0 0.0
  %112 = vmatpush1.msra.mxu0 %v105
  %113 = vmatprep.subr.mxu0 0.0
  %114 = vmatpush1.msra.mxu0 %v106
  %115 = vmatprep.subr.mxu0 0.0
  %116 = vmatpush1.msra.mxu0 0.0
  %117 = vmatprep.subr.mxu0 0.0
  %118 = vmatpush1.msra.mxu0 0.0
  %119 = vmatprep.subr.mxu0 0.0
  %120 = vmatpush1.msra.mxu0 0.0
  %121 = vmatprep.subr.mxu0 0.0
  %122 = vmatpush1.msra.mxu0 0.0
  %123 = vmatprep.subr.mxu0 0.0
  %124 = vmatpush1.msra.mxu0 0.0
  %125 = vmatprep.subr.mxu0 0.0
  %126 = vmatpush1.msra.mxu0 0.0
  %127 = vmatprep.subr.mxu0 0.0
  %128 = vmatpush1.msra.mxu0 0.0
  %129 = vmatprep.subr.mxu0 0.0
  %130 = vmatpush1.msra.mxu0 0.0
  %131 = vmatprep.subr.mxu0 0.0
  %132 = vmatpush1.msra.mxu0 0.0
  %133 = vmatprep.subr.mxu0 0.0
  %134 = vmatpush1.msra.mxu0 0.0
  %135 = vmatprep.subr.mxu0 0.0
  %136 = vmatpush1.msra.mxu0 0.0
  %137 = vmatprep.subr.mxu0 0.0
  %138 = vmatpush1.msra.mxu0 0.0
  %139 = vmatprep.subr.mxu0 0.0
  %140 = vmatpush1.msra.mxu0 0.0
  %141 = vmatprep.subr.mxu0 0.0
  %142 = vmatpush1.msra.mxu0 0.0
  %143 = vmatprep.subr.mxu0 0.0
  %144 = vmatpush1.msra.mxu0 0.0
  %145 = vmatprep.subr.mxu0 0.0
  %146 = vmatpush1.msra.mxu0 0.0
  %147 = vmatprep.subr.mxu0 0.0
  %148 = vmatpush1.msra.mxu0 0.0
  %149 = vmatprep.subr.mxu0 0.0
  %150 = vmatpush1.msra.mxu0 0.0
  %151 = vmatprep.subr.mxu0 0.0
  %152 = vmatpush1.msra.mxu0 0.0
  %153 = vmatprep.subr.mxu0 0.0
  %154 = vmatpush1.msra.mxu0 0.0
  %155 = vmatprep.subr.mxu0 0.0
  %156 = vmatpush1.msra.mxu0 0.0
  %157 = vmatprep.subr.mxu0 0.0
  %158 = vmatpush1.msra.mxu0 0.0
  %159 = vmatprep.subr.mxu0 0.0
  %160 = vmatpush1.msra.mxu0 0.0
  %161 = vmatprep.subr.mxu0 0.0
  %162 = vmatpush1.msra.mxu0 0.0
  %163 = vmatprep.subr.mxu0 0.0
  %164 = vmatpush1.msra.mxu0 0.0
  %165 = vmatprep.subr.mxu0 0.0
  %166 = vmatpush1.msra.mxu0 0.0
  %167 = vmatprep.subr.mxu0 0.0
  %168 = vmatpush1.msra.mxu0 0.0
  %169 = vmatprep.subr.mxu0 0.0
  %170 = vmatpush1.msra.mxu0 0.0
  %171 = vmatprep.mubr.f32.mxu0 0.0
  %172 = vmatmul.mubr.f32.gmra.mrb[0].mxu0 %v22
  %v173 = vpop.f32.mrb[0].mxu0
  %v174 = vadd.f32 0.0, %v173
  %v175 = vpop.f32.mrb[0].mxu0
  %176 = vmatprep.mubr.f32.mxu0 0.0
  %177 = vmatmul.mubr.f32.gmra.mrb[0].mxu0 %v25
  %v178 = vpop.f32.mrb[0].mxu0
  %v179 = vadd.f32 0.0, %v178
  %v180 = vpop.f32.mrb[0].mxu0
  %181 = vdwg.mxu0
  %s182 = scalar_lea.vmem %s1, 64
  %v183 = vld [vmem:[%s182] sm:$0xff]
  %v184 = vld [vmem:[%s182 + $0x8] sm:$0xff]
  %v185 = vld [vmem:[%s182 + $0x10] sm:$0xff]
  %v186 = vld [vmem:[%s182 + $0x18] sm:$0xff]
  %187 = vmatprep.subr.mxu0 0.0
  %188 = vmatpush1.msra.mxu0 %v183
  %189 = vmatprep.subr.mxu0 0.0
  %190 = vmatpush1.msra.mxu0 %v184
  %191 = vmatprep.subr.mxu0 0.0
  %192 = vmatpush1.msra.mxu0 %v185
  %193 = vmatprep.subr.mxu0 0.0
  %194 = vmatpush1.msra.mxu0 %v186
  %195 = vmatprep.subr.mxu0 0.0
  %196 = vmatpush1.msra.mxu0 0.0
  %197 = vmatprep.subr.mxu0 0.0
  %198 = vmatpush1.msra.mxu0 0.0
  %199 = vmatprep.subr.mxu0 0.0
  %200 = vmatpush1.msra.mxu0 0.0
  %201 = vmatprep.subr.mxu0 0.0
  %202 = vmatpush1.msra.mxu0 0.0
  %203 = vmatprep.subr.mxu0 0.0
  %204 = vmatpush1.msra.mxu0 0.0
  %205 = vmatprep.subr.mxu0 0.0
  %206 = vmatpush1.msra.mxu0 0.0
  %207 = vmatprep.subr.mxu0 0.0
  %208 = vmatpush1.msra.mxu0 0.0
  %209 = vmatprep.subr.mxu0 0.0
  %210 = vmatpush1.msra.mxu0 0.0
  %211 = vmatprep.subr.mxu0 0.0
  %212 = vmatpush1.msra.mxu0 0.0
  %213 = vmatprep.subr.mxu0 0.0
  %214 = vmatpush1.msra.mxu0 0.0
  %215 = vmatprep.subr.mxu0 0.0
  %216 = vmatpush1.msra.mxu0 0.0
  %217 = vmatprep.subr.mxu0 0.0
  %218 = vmatpush1.msra.mxu0 0.0
  %219 = vmatprep.subr.mxu0 0.0
  %220 = vmatpush1.msra.mxu0 0.0
  %221 = vmatprep.subr.mxu0 0.0
  %222 = vmatpush1.msra.mxu0 0.0
  %223 = vmatprep.subr.mxu0 0.0
  %224 = vmatpush1.msra.mxu0 0.0
  %225 = vmatprep.subr.mxu0 0.0
  %226 = vmatpush1.msra.mxu0 0.0
  %227 = vmatprep.subr.mxu0 0.0
  %228 = vmatpush1.msra.mxu0 0.0
  %229 = vmatprep.subr.mxu0 0.0
  %230 = vmatpush1.msra.mxu0 0.0
  %231 = vmatprep.subr.mxu0 0.0
  %232 = vmatpush1.msra.mxu0 0.0
  %233 = vmatprep.subr.mxu0 0.0
  %234 = vmatpush1.msra.mxu0 0.0
  %235 = vmatprep.subr.mxu0 0.0
  %236 = vmatpush1.msra.mxu0 0.0
  %237 = vmatprep.subr.mxu0 0.0
  %238 = vmatpush1.msra.mxu0 0.0
  %239 = vmatprep.subr.mxu0 0.0
  %240 = vmatpush1.msra.mxu0 0.0
  %241 = vmatprep.subr.mxu0 0.0
  %242 = vmatpush1.msra.mxu0 0.0
  %243 = vmatprep.subr.mxu0 0.0
  %244 = vmatpush1.msra.mxu0 0.0
  %245 = vmatprep.subr.mxu0 0.0
  %246 = vmatpush1.msra.mxu0 0.0
  %247 = vmatprep.subr.mxu0 0.0
  %248 = vmatpush1.msra.mxu0 0.0
  %249 = vmatprep.subr.mxu0 0.0
  %250 = vmatpush1.msra.mxu0 0.0
  %251 = vmatprep.mubr.f32.mxu0 0.0
  %252 = vmatmul.mubr.f32.gmra.mrb[0].mxu0 %v22
  %v253 = vpop.f32.mrb[0].mxu0
  %v254 = vadd.f32 0.0, %v253
  %v255 = vpop.f32.mrb[0].mxu0
  %256 = vmatprep.mubr.f32.mxu0 0.0
  %257 = vmatmul.mubr.f32.gmra.mrb[0].mxu0 %v25
  %v258 = vpop.f32.mrb[0].mxu0
  %v259 = vadd.f32 0.0, %v258
  %v260 = vpop.f32.mrb[0].mxu0
  %261 = vdwg.mxu0
  %v262 = vld [vmem:[%s2] sm:$0xff]
  %v263 = vld [vmem:[%s2 + $0x8] sm:$0xff]
  %vm264 = vcmask 64512
  %v266 = vsel %vm264, %v94, 0
  %v269 = vsel %vm264, %v99, 0
  %v272 = vsel %vm264, %v174, 0
  %v275 = vsel %vm264, %v179, 0
  %277 = vmatprep.subr.mxu0 0.0
  %278 = vmatpush1.xpose.msra.mxu0 %v272
  %279 = vmatprep.subr.mxu0 0.0
  %280 = vmatpush1.xpose.msra.mxu0 %v275
  %281 = vmatprep.subr.mxu0 0.0
  %282 = vmatpush1.xpose.msra.mxu0 0.0
  %283 = vmatprep.subr.mxu0 0.0
  %284 = vmatpush1.xpose.msra.mxu0 0.0
  %285 = vmatprep.subr.mxu0 0.0
  %286 = vmatpush1.xpose.msra.mxu0 0.0
  %287 = vmatprep.subr.mxu0 0.0
  %288 = vmatpush1.xpose.msra.mxu0 0.0
  %289 = vmatprep.subr.mxu0 0.0
  %290 = vmatpush1.xpose.msra.mxu0 0.0
  %291 = vmatprep.subr.mxu0 0.0
  %292 = vmatpush1.xpose.msra.mxu0 0.0
  %293 = vmatprep.subr.mxu0 0.0
  %294 = vmatpush1.xpose.msra.mxu0 0.0
  %295 = vmatprep.subr.mxu0 0.0
  %296 = vmatpush1.xpose.msra.mxu0 0.0
  %297 = vmatprep.subr.mxu0 0.0
  %298 = vmatpush1.xpose.msra.mxu0 0.0
  %299 = vmatprep.subr.mxu0 0.0
  %300 = vmatpush1.xpose.msra.mxu0 0.0
  %301 = vmatprep.subr.mxu0 0.0
  %302 = vmatpush1.xpose.msra.mxu0 0.0
  %303 = vmatprep.subr.mxu0 0.0
  %304 = vmatpush1.xpose.msra.mxu0 0.0
  %305 = vmatprep.subr.mxu0 0.0
  %306 = vmatpush1.xpose.msra.mxu0 0.0
  %307 = vmatprep.subr.mxu0 0.0
  %308 = vmatpush1.xpose.msra.mxu0 0.0
  %309 = vmatprep.subr.mxu0 0.0
  %310 = vmatpush1.xpose.msra.mxu0 0.0
  %311 = vmatprep.subr.mxu0 0.0
  %312 = vmatpush1.xpose.msra.mxu0 0.0
  %313 = vmatprep.subr.mxu0 0.0
  %314 = vmatpush1.xpose.msra.mxu0 0.0
  %315 = vmatprep.subr.mxu0 0.0
  %316 = vmatpush1.xpose.msra.mxu0 0.0
  %317 = vmatprep.subr.mxu0 0.0
  %318 = vmatpush1.xpose.msra.mxu0 0.0
  %319 = vmatprep.subr.mxu0 0.0
  %320 = vmatpush1.xpose.msra.mxu0 0.0
  %321 = vmatprep.subr.mxu0 0.0
  %322 = vmatpush1.xpose.msra.mxu0 0.0
  %323 = vmatprep.subr.mxu0 0.0
  %324 = vmatpush1.xpose.msra.mxu0 0.0
  %325 = vmatprep.subr.mxu0 0.0
  %326 = vmatpush1.xpose.msra.mxu0 0.0
  %327 = vmatprep.subr.mxu0 0.0
  %328 = vmatpush1.xpose.msra.mxu0 0.0
  %329 = vmatprep.subr.mxu0 0.0
  %330 = vmatpush1.xpose.msra.mxu0 0.0
  %331 = vmatprep.subr.mxu0 0.0
  %332 = vmatpush1.xpose.msra.mxu0 0.0
  %333 = vmatprep.subr.mxu0 0.0
  %334 = vmatpush1.xpose.msra.mxu0 0.0
  %335 = vmatprep.subr.mxu0 0.0
  %336 = vmatpush1.xpose.msra.mxu0 0.0
  %337 = vmatprep.subr.mxu0 0.0
  %338 = vmatpush1.xpose.msra.mxu0 0.0
  %339 = vmatprep.subr.mxu0 0.0
  %340 = vmatpush1.xpose.msra.mxu0 0.0
  %341 = vmatprep.mubr.f32.mxu0 0.0
  %342 = vmatmul.mubr.f32.gmra.mrb[0].mxu0 %v266
  %v343 = vpop.f32.mrb[0].mxu0
  %v344 = vadd.f32 %v262, %v343
  %v345 = vpop.f32.mrb[0].mxu0
  %346 = vmatprep.mubr.f32.mxu0 0.0
  %347 = vmatmul.mubr.f32.gmra.mrb[0].mxu0 %v269
  %v348 = vpop.f32.mrb[0].mxu0
  %v349 = vadd.f32 %v263, %v348
  %v350 = vpop.f32.mrb[0].mxu0
  %351 = vdwg.mxu0
  %vm352 = vcmask 130048
  %v353 = vsel %vm352, %v344, -inf
  %354 = vmax.xlane.f32.xlu0 %v353
  %v355 = vpop.xlane.xlu0 %354
  %v356 = vsel %vm352, %v349, -inf
  %357 = vmax.xlane.f32.xlu0 %v356
  %v358 = vpop.xlane.xlu0 %357
  %v359 = vsub.f32 %v344, %v355
  %v360 = vsub.f32 %v349, %v358
  %v361 = vmul.f32 %v359, 1.442695
  %v362 = vpow.pop %v361
  %v363 = vmul.f32 %v360, 1.442695
  %v364 = vpow.pop %v363
  %v365 = vsel %vm352, %v362, 0.0
  %366 = vadd.xlane.f32.xlu0 %v365
  %v367 = vpop.xlane.xlu0 %366
  %v368 = vsel %vm352, %v364, 0.0
  %369 = vadd.xlane.f32.xlu0 %v368
  %v370 = vpop.xlane.xlu0 %369
  %v371 = vrcp.pop %v367
  %v372 = vmul.f32 %v362, %v371
  %v373 = vrcp.pop %v370
  %v374 = vmul.f32 %v364, %v373
  %v376 = vsel %vm352, %v372, 0
  %v379 = vsel %vm352, %v374, 0
  %381 = vmatprep.subr.mxu0 0.0
  %382 = vmatpush1.msra.mxu0 %v254
  %383 = vmatprep.subr.mxu0 0.0
  %384 = vmatpush1.msra.mxu0 %v259
  %385 = vmatprep.subr.mxu0 0.0
  %386 = vmatpush1.msra.mxu0 0.0
  %387 = vmatprep.subr.mxu0 0.0
  %388 = vmatpush1.msra.mxu0 0.0
  %389 = vmatprep.subr.mxu0 0.0
  %390 = vmatpush1.msra.mxu0 0.0
  %391 = vmatprep.subr.mxu0 0.0
  %392 = vmatpush1.msra.mxu0 0.0
  %393 = vmatprep.subr.mxu0 0.0
  %394 = vmatpush1.msra.mxu0 0.0
  %395 = vmatprep.subr.mxu0 0.0
  %396 = vmatpush1.msra.mxu0 0.0
  %397 = vmatprep.subr.mxu0 0.0
  %398 = vmatpush1.msra.mxu0 0.0
  %399 = vmatprep.subr.mxu0 0.0
  %400 = vmatpush1.msra.mxu0 0.0
  %401 = vmatprep.subr.mxu0 0.0
  %402 = vmatpush1.msra.mxu0 0.0
  %403 = vmatprep.subr.mxu0 0.0
  %404 = vmatpush1.msra.mxu0 0.0
  %405 = vmatprep.subr.mxu0 0.0
  %406 = vmatpush1.msra.mxu0 0.0
  %407 = vmatprep.subr.mxu0 0.0
  %408 = vmatpush1.msra.mxu0 0.0
  %409 = vmatprep.subr.mxu0 0.0
  %410 = vmatpush1.msra.mxu0 0.0
  %411 = vmatprep.subr.mxu0 0.0
  %412 = vmatpush1.msra.mxu0 0.0
  %413 = vmatprep.subr.mxu0 0.0
  %414 = vmatpush1.msra.mxu0 0.0
  %415 = vmatprep.subr.mxu0 0.0
  %416 = vmatpush1.msra.mxu0 0.0
  %417 = vmatprep.subr.mxu0 0.0
  %418 = vmatpush1.msra.mxu0 0.0
  %419 = vmatprep.subr.mxu0 0.0
  %420 = vmatpush1.msra.mxu0 0.0
  %421 = vmatprep.subr.mxu0 0.0
  %422 = vmatpush1.msra.mxu0 0.0
  %423 = vmatprep.subr.mxu0 0.0
  %424 = vmatpush1.msra.mxu0 0.0
  %425 = vmatprep.subr.mxu0 0.0
  %426 = vmatpush1.msra.mxu0 0.0
  %427 = vmatprep.subr.mxu0 0.0
  %428 = vmatpush1.msra.mxu0 0.0
  %429 = vmatprep.subr.mxu0 0.0
  %430 = vmatpush1.msra.mxu0 0.0
  %431 = vmatprep.subr.mxu0 0.0
  %432 = vmatpush1.msra.mxu0 0.0
  %433 = vmatprep.subr.mxu0 0.0
  %434 = vmatpush1.msra.mxu0 0.0
  %435 = vmatprep.subr.mxu0 0.0
  %436 = vmatpush1.msra.mxu0 0.0
  %437 = vmatprep.subr.mxu0 0.0
  %438 = vmatpush1.msra.mxu0 0.0
  %439 = vmatprep.subr.mxu0 0.0
  %440 = vmatpush1.msra.mxu0 0.0
  %441 = vmatprep.subr.mxu0 0.0
  %442 = vmatpush1.msra.mxu0 0.0
  %443 = vmatprep.subr.mxu0 0.0
  %444 = vmatpush1.msra.mxu0 0.0
  %445 = vmatprep.mubr.f32.mxu0 0.0
  %446 = vmatmul.mubr.f32.gmra.mrb[0].mxu0 %v376
  %v447 = vpop.f32.mrb[0].mxu0
  %v448 = vadd.f32 0.0, %v447
  %v449 = vpop.f32.mrb[0].mxu0
  %450 = vmatprep.mubr.f32.mxu0 0.0
  %451 = vmatmul.mubr.f32.gmra.mrb[0].mxu0 %v379
  %v452 = vpop.f32.mrb[0].mxu0
  %v453 = vadd.f32 0.0, %v452
  %v454 = vpop.f32.mrb[0].mxu0
  %455 = vdwg.mxu0
  %456 = vst.msk [vmem:[%s3] sm:$0xff] %vm264, %v448
  %457 = vst.msk [vmem:[%s3 + $0x8] sm:$0xff] %vm264, %v453
  // Predicated region
  $region14: #{tpu_custom_call.1} parent=0 // pred_check
    _
  $region15: #{tpu_custom_call.1} parent=0 // pred_check_branch
    %459 = sbr.rel (0) target = $region17
  $region16: #{tpu_custom_call.1} parent=0 // pred_region
    _
  $region17: #{tpu_custom_call.1} parent=0 // pred_fallthru
    _
  // Predicated region
  $region18: #{tpu_custom_call.1} parent=0 // pred_check
    _
  $region19: #{tpu_custom_call.1} parent=0 // pred_check_branch
    %461 = sbr.rel (0) target = $region21
  $region20: #{tpu_custom_call.1} parent=0 // pred_region
    _
  $region21: #{tpu_custom_call.1} parent=0 // pred_fallthru
    _

</llo_original>
